<compile_context>
chip_gen: v6e
topology: v6e:2x2x1
jax: 0.10.0
libtpu: 0.0.40
codegen_flags: <defaults>
</compile_context>

<pallas_src>
import functools
import inspect
from typing import NamedTuple

import jax
import jax.numpy as jnp
from jax.experimental import pallas as pl
from jax.experimental.pallas import tpu as pltpu


_LANE = 128
_SUBLANE = 8

# Row indices inside the packed (16, d_pad) per-feature parameter array.
# (The linear pairs are folded offline, so only fused biases remain.)
_BS, _BC, _B2 = 0, 1, 2
_G1, _BE1, _G2, _BE2, _G3, _BE3 = 3, 4, 5, 6, 7, 8
_N_VEC_ROWS = 16  # padded to a sublane multiple


def _round_up(x, m):
    return (x + m - 1) // m * m


def _pad2d(a, rows, cols):
    r, c = a.shape
    if r == rows and c == cols:
        return a
    return jnp.pad(a, ((0, rows - r), (0, cols - c)))


class PreparedWeights(NamedTuple):
    """Folded / padded / packed weights (device arrays). Prepare once, reuse."""
    ws: jax.Array    # (d_pad, d_pad)   fused self-projection weight (compute dtype)
    wc: jax.Array    # (d_pad, d_pad)   fused cross-projection weight
    w1: jax.Array    # (d_pad, dff_pad) feed-forward in
    w2: jax.Array    # (dff_pad, d_pad) feed-forward out
    vec: jax.Array   # (16, d_pad) f32  fused biases + LayerNorm params
    b1: jax.Array    # (1, dff_pad) f32 feed-forward bias


def prepare_decoder_weights(params, *, compute_dtype=jnp.bfloat16):
    """One-time host-side folding/padding/packing (hoisted out of the call path)."""
    D = params["ws_in"].shape[0]
    dff = params["w1"].shape[1]
    d_pad = _round_up(D, _LANE)
    dff_pad = _round_up(dff, _LANE)
    f32 = jnp.float32

    # Fold each activation-free linear pair in f32 (exact), then cast:
    #   (x @ A + a) @ B + b == x @ (A @ B) + (a @ B + b)
    ws = params["ws_in"].astype(f32) @ params["ws_out"].astype(f32)
    bs = params["bs_in"].astype(f32) @ params["ws_out"].astype(f32) + params["bs_out"].astype(f32)
    wc = params["wc_in"].astype(f32) @ params["wc_out"].astype(f32)
    bc = params["bc_in"].astype(f32) @ params["wc_out"].astype(f32) + params["bc_out"].astype(f32)

    # Pack every (1, D) bias / LayerNorm parameter into one (16, d_pad) f32
    # array: one replicated BlockSpec, one DMA.  Padded rows/lanes are zero.
    vec = jnp.zeros((_N_VEC_ROWS, d_pad), f32)
    rows = [(_BS, bs), (_BC, bc), (_B2, params["b2"]),
            (_G1, params["g1"]), (_BE1, params["be1"]),
            (_G2, params["g2"]), (_BE2, params["be2"]),
            (_G3, params["g3"]), (_BE3, params["be3"])]
    for r, val in rows:
        vec = vec.at[r, :D].set(jnp.asarray(val, f32).reshape(-1))

    return PreparedWeights(
        ws=_pad2d(ws, d_pad, d_pad).astype(compute_dtype),
        wc=_pad2d(wc, d_pad, d_pad).astype(compute_dtype),
        w1=_pad2d(params["w1"].astype(f32), d_pad, dff_pad).astype(compute_dtype),
        w2=_pad2d(params["w2"].astype(f32), dff_pad, d_pad).astype(compute_dtype),
        vec=vec,
        b1=_pad2d(params["b1"].reshape(1, dff).astype(f32), 1, dff_pad),
    )


@functools.lru_cache(maxsize=None)
def _buffered_supported():
    """One-time capability probe: does this build honor pipeline_mode=pl.Buffered?"""
    if not hasattr(pl, "Buffered"):
        return False
    try:
        if "pipeline_mode" not in inspect.signature(pl.BlockSpec).parameters:
            return False
    except (TypeError, ValueError):
        pass

    def _k(x_ref, o_ref):
        o_ref[...] = x_ref[...] + 1.0

    try:
        fn = pl.pallas_call(
            _k,
            out_shape=jax.ShapeDtypeStruct((_SUBLANE, _LANE), jnp.float32),
            grid=(1,),
            in_specs=[pl.BlockSpec((_SUBLANE, _LANE), lambda i: (0, 0),
                                   pipeline_mode=pl.Buffered(1))],
            out_specs=pl.BlockSpec((_SUBLANE, _LANE), lambda i: (0, 0)),
        )
        jax.jit(fn).lower(
            jax.ShapeDtypeStruct((_SUBLANE, _LANE), jnp.float32)).compile()
        return True
    except Exception:  # capability probe only -- never masks the real kernel
        return False


def _vmem_capacity_bytes():
    try:
        return int(pltpu.get_tpu_info().vmem_capacity_bytes)
    except Exception:
        return 64 * 1024 * 1024  # conservative default (v7x per-TC VMEM)


def _vmem_estimate(tm, d_pad, dff_pad, ffn_ck, act_bytes, w_bytes, single_buffered):
    wfac = 1 if single_buffered else 2
    weights = (2 * d_pad * d_pad + 2 * d_pad * dff_pad) * w_bytes * wfac
    weights += (_N_VEC_ROWS * d_pad + _SUBLANE * dff_pad) * 4 * wfac
    act = 2 * 2 * tm * d_pad * act_bytes          # tgt + mem tiles, double-buffered
    out = 2 * tm * d_pad * 4                      # f32 output tile, double-buffered
    temps = 6 * tm * d_pad * 4 + 2 * tm * min(ffn_ck, dff_pad) * 4
    return weights + act + out + temps


def _pick_tile_rows(n, requested):
    n8 = _round_up(n, _SUBLANE)
    req = max(_SUBLANE, min(_round_up(requested, _SUBLANE), n8))
    # Prefer a tile that divides round_up(N, 8) exactly (no host-side row pad
    # / output slice copy), but never drop below half the requested size.
    for cand in (req, 1024, 768, 512, 384, 256, 128):
        if cand <= req and 2 * cand >= req and n8 % cand == 0:
            return cand
    return req


def _decoder_layer_kernel(tgt_ref, mem_ref, ws_ref, wc_ref, w1_ref, w2_ref,
                          vec_ref, b1_ref, out_ref,
                          *, eps, d_valid, compute_dtype, ffn_chunk):
    vec = vec_ref[...]                              # (16, d_pad) f32
    d_pad = tgt_ref.shape[-1]
    inv_d = 1.0 / d_valid

    # Hoisted padded-lane mask (only needed when D is not a lane multiple).
    if d_valid != d_pad:
        lane_mask = jax.lax.broadcasted_iota(jnp.int32, (1, d_pad), 1) < d_valid
    else:
        lane_mask = None

    def ln(x, g, b):
        mu = jnp.sum(x, axis=-1, keepdims=True) * inv_d
        xc = x - mu
        if lane_mask is not None:
            xc = jnp.where(lane_mask, xc, 0.0)      # padded lanes stay exactly 0
        var = jnp.sum(xc * xc, axis=-1, keepdims=True) * inv_d
        return xc * jax.lax.rsqrt(var + eps) * g + b

    tgt_in = tgt_ref[...]
    mem_in = mem_ref[...]
    tgt_c = tgt_in.astype(compute_dtype)
    mem_c = mem_in.astype(compute_dtype)

    # ---- self projection (pre-folded linear pair), residual, LN1 ----
    s = jnp.dot(tgt_c, ws_ref[...], preferred_element_type=jnp.float32) + vec[_BS:_BS + 1]
    x = ln(tgt_in.astype(jnp.float32) + s,
           vec[_G1:_G1 + 1], vec[_BE1:_BE1 + 1])            # dropout1 == id (eval)

    # ---- cross projection (pre-folded linear pair) on memory, residual, LN2 ----
    c = jnp.dot(mem_c, wc_ref[...], preferred_element_type=jnp.float32) + vec[_BC:_BC + 1]
    x = ln(x + c, vec[_G2:_G2 + 1], vec[_BE2:_BE2 + 1])     # dropout2 == id (eval)

    # ---- feed-forward (dff-chunked): linear1 -> relu -> linear2, residual, LN3 ----
    x_c = x.astype(compute_dtype)
    dff_pad = w1_ref.shape[-1]
    ck = min(ffn_chunk, dff_pad)
    f = None
    for start in range(0, dff_pad, ck):
        sl = slice(start, min(start + ck, dff_pad))
        h = jnp.maximum(
            jnp.dot(x_c, w1_ref[:, sl], preferred_element_type=jnp.float32)
            + b1_ref[:, sl], 0.0).astype(compute_dtype)      # dropout == id (eval)
        part = jnp.dot(h, w2_ref[sl, :], preferred_element_type=jnp.float32)
        f = part if f is None else f + part
    x = ln(x + f + vec[_B2:_B2 + 1],
           vec[_G3:_G3 + 1], vec[_BE3:_BE3 + 1])             # dropout3 == id (eval)

    out_ref[...] = x.astype(out_ref.dtype)


def mlp_decoder_layer(tgt, memory, weights: PreparedWeights, *,
                      eps=1e-5, tile_rows=512, ffn_chunk=1024):
    """tgt, memory: (B, L, D). Returns (B, L, D) float32.

    `weights` comes from prepare_decoder_weights (folded/padded/packed once).
    Jit-friendly: no blocking, no data-dependent Python control flow.
    """
    B, L, D = tgt.shape
    N = B * L
    d_pad = weights.ws.shape[0]
    dff_pad = weights.w1.shape[1]
    assert d_pad == _round_up(D, _LANE), "prepared weights do not match d_model"

    compute_dtype = weights.ws.dtype
    act_dtype = jnp.bfloat16 if compute_dtype == jnp.bfloat16 else jnp.float32
    act_bytes = jnp.dtype(act_dtype).itemsize
    w_bytes = jnp.dtype(compute_dtype).itemsize
    ffn_chunk = _round_up(max(ffn_chunk, _LANE), _LANE)

    single_buffered = _buffered_supported()

    # Row tile: as large as the VMEM budget allows; auto-shrink if needed.
    tm = _pick_tile_rows(N, tile_rows)
    capacity = _vmem_capacity_bytes()
    budget = int(capacity * 0.8)
    while tm > 2 * _SUBLANE and _vmem_estimate(
            tm, d_pad, dff_pad, ffn_chunk, act_bytes, w_bytes, single_buffered) > budget:
        tm = max(_SUBLANE, _round_up(tm // 2, _SUBLANE))
    num_tiles = (N + tm - 1) // tm
    n_pad = num_tiles * tm

    est = _vmem_estimate(tm, d_pad, dff_pad, ffn_chunk, act_bytes, w_bytes,
                         single_buffered)
    vmem_limit = int(min(capacity * 0.85, max(est + (8 << 20), 32 << 20)))

    tgt2d = _pad2d(tgt.reshape(N, D).astype(act_dtype), n_pad, d_pad)
    mem2d = _pad2d(memory.reshape(N, D).astype(act_dtype), n_pad, d_pad)

    row_spec = pl.BlockSpec((tm, d_pad), lambda i: (i, 0))
    out_spec = pl.BlockSpec((tm, d_pad), lambda i: (i, 0))

    def rep(shape):
        if single_buffered:
            # Grid-invariant operand: one resident VMEM copy instead of the
            # default double buffer -> frees VMEM for larger row tiles.
            return pl.BlockSpec(shape, lambda i: (0, 0),
                                pipeline_mode=pl.Buffered(1))
        return pl.BlockSpec(shape, lambda i: (0, 0))

    kernel = functools.partial(
        _decoder_layer_kernel, eps=eps, d_valid=D,
        compute_dtype=compute_dtype, ffn_chunk=ffn_chunk)

    flops = 2 * N * (2 * D * D + 2 * D * dff_pad)
    bytes_accessed = (n_pad * d_pad * (2 * act_bytes + 4)
                      + (2 * d_pad * d_pad + 2 * d_pad * dff_pad) * w_bytes
                      + (_N_VEC_ROWS * d_pad + dff_pad) * 4)
    cost = pl.CostEstimate(flops=flops, transcendentals=3 * N,
                           bytes_accessed=bytes_accessed)

    out2d = pl.pallas_call(
        kernel,
        out_shape=jax.ShapeDtypeStruct((n_pad, d_pad), jnp.float32),
        grid_spec=pltpu.PrefetchScalarGridSpec(
            num_scalar_prefetch=0,
            grid=(num_tiles,),
            in_specs=[row_spec, row_spec,
                      rep((d_pad, d_pad)), rep((d_pad, d_pad)),
                      rep((d_pad, dff_pad)), rep((dff_pad, d_pad)),
                      rep((_N_VEC_ROWS, d_pad)), rep((1, dff_pad))],
            out_specs=out_spec),
        compiler_params=pltpu.CompilerParams(
            dimension_semantics=("parallel",),   # row axis shards across TCs
            vmem_limit_bytes=vmem_limit),
        cost_estimate=cost,
    )(tgt2d, mem2d, weights.ws, weights.wc, weights.w1, weights.w2,
      weights.vec, weights.b1)

    if n_pad != N or d_pad != D:
        out2d = out2d[:N, :D]
    return out2d.reshape(B, L, D)


# ----------------------------- reference & test ------------------------------

def _reference(tgt, memory, p, eps=1e-5):
    def ln(x, g, b):
        mu = jnp.mean(x, axis=-1, keepdims=True)
        var = jnp.mean((x - mu) ** 2, axis=-1, keepdims=True)
        return (x - mu) / jnp.sqrt(var + eps) * g + b

    s = (tgt @ p["ws_in"] + p["bs_in"]) @ p["ws_out"] + p["bs_out"]
    x = ln(tgt + s, p["g1"], p["be1"])
    c = (memory @ p["wc_in"] + p["bc_in"]) @ p["wc_out"] + p["bc_out"]
    x = ln(x + c, p["g2"], p["be2"])
    f = jnp.maximum(x @ p["w1"] + p["b1"], 0.0) @ p["w2"] + p["b2"]
    x = ln(x + f, p["g3"], p["be3"])
    return x


def make_params(key, d_model, dff):
    ks = jax.random.split(key, 8)
    scale = 0.1

    def w(k, shape):
        return scale * jax.random.normal(k, shape, dtype=jnp.float32)

    return {
        # weights stored as (in_features, out_features) == W_pytorch.T
        "ws_in": w(ks[0], (d_model, d_model)), "bs_in": jnp.zeros((1, d_model), jnp.float32),
        "ws_out": w(ks[1], (d_model, d_model)), "bs_out": w(ks[2], (1, d_model)),
        "wc_in": w(ks[3], (d_model, d_model)), "bc_in": jnp.zeros((1, d_model), jnp.float32),
        "wc_out": w(ks[4], (d_model, d_model)), "bc_out": w(ks[5], (1, d_model)),
        "w1": w(ks[6], (d_model, dff)), "b1": jnp.full((1, dff), 0.01, jnp.float32),
        "w2": w(ks[7], (dff, d_model)), "b2": jnp.full((1, d_model), -0.01, jnp.float32),
        "g1": jnp.ones((1, d_model), jnp.float32), "be1": jnp.zeros((1, d_model), jnp.float32),
        "g2": jnp.ones((1, d_model), jnp.float32), "be2": jnp.zeros((1, d_model), jnp.float32),
        "g3": jnp.ones((1, d_model), jnp.float32), "be3": jnp.zeros((1, d_model), jnp.float32),
    }


if __name__ == "__main__":
    B, L, D, DFF = 2, 8, 32, 64
    key = jax.random.PRNGKey(0)
    k_tgt, k_mem, k_par = jax.random.split(key, 3)

    tgt = jax.random.normal(k_tgt, (B, L, D), dtype=jnp.float32)
    memory = jax.random.normal(k_mem, (B, L, D), dtype=jnp.float32)
    params = make_params(k_par, D, DFF)

    ref = _reference(tgt.reshape(B * L, D), memory.reshape(B * L, D),
                     params).reshape(B, L, D)

    _buffered_supported()  # warm the one-time capability probe

    fwd = jax.jit(mlp_decoder_layer,
                  static_argnames=("eps", "tile_rows", "ffn_chunk"))

    # Exact path: f32 weights/activations must track the f32 reference tightly.
    prep_f32 = prepare_decoder_weights(params, compute_dtype=jnp.float32)
    out_f32 = jax.block_until_ready(fwd(tgt, memory, prep_f32))
    assert out_f32.shape == (B, L, D)
    assert jnp.allclose(out_f32, ref, atol=1e-4, rtol=1e-4), (
        f"f32 max abs err {jnp.max(jnp.abs(out_f32 - ref))}")

    # Fast path: bf16 weights + bf16 activation DMA, f32 accumulation.
    prep_bf16 = prepare_decoder_weights(params, compute_dtype=jnp.bfloat16)
    out = jax.block_until_ready(fwd(tgt, memory, prep_bf16))
    assert out.shape == (B, L, D)
    assert jnp.allclose(out, ref, atol=5e-2, rtol=5e-2), (
        f"bf16 max abs err {jnp.max(jnp.abs(out - ref))}")

    print("KERNEL_OK")
</pallas_src>

<mosaic_0001>
module attributes {stable_mosaic.version = 11 : i64} {
  func.func @_decoder_layer_kernel(%arg0: i32, %arg1: memref<16x128xf32, #tpu.memory_space<vmem>>, %arg2: memref<16x128xf32, #tpu.memory_space<vmem>>, %arg3: memref<128x128xf32, #tpu.memory_space<vmem>>, %arg4: memref<128x128xf32, #tpu.memory_space<vmem>>, %arg5: memref<128x128xf32, #tpu.memory_space<vmem>>, %arg6: memref<128x128xf32, #tpu.memory_space<vmem>>, %arg7: memref<16x128xf32, #tpu.memory_space<vmem>>, %arg8: memref<1x128xf32, #tpu.memory_space<vmem>>, %arg9: memref<16x128xf32, #tpu.memory_space<vmem>>) attributes {dimension_semantics = [#tpu.dimension_semantics<parallel>], iteration_bounds = array<i64: 1>, scalar_prefetch = 0 : i64, scratch_operands = 0 : i64, tpu.core_type = #tpu.core_type<tc>, window_params = [{transform_indices = @transform_0, window_bounds = array<i64: 16, 128>}, {transform_indices = @transform_1, window_bounds = array<i64: 16, 128>}, {pipeline_mode = #tpu.pipeline_mode<synchronous>, transform_indices = @transform_2, window_bounds = array<i64: 128, 128>}, {pipeline_mode = #tpu.pipeline_mode<synchronous>, transform_indices = @transform_3, window_bounds = array<i64: 128, 128>}, {pipeline_mode = #tpu.pipeline_mode<synchronous>, transform_indices = @transform_4, window_bounds = array<i64: 128, 128>}, {pipeline_mode = #tpu.pipeline_mode<synchronous>, transform_indices = @transform_5, window_bounds = array<i64: 128, 128>}, {pipeline_mode = #tpu.pipeline_mode<synchronous>, transform_indices = @transform_6, window_bounds = array<i64: 16, 128>}, {pipeline_mode = #tpu.pipeline_mode<synchronous>, transform_indices = @transform_7, window_bounds = array<i64: 1, 128>}, {transform_indices = @transform_8, window_bounds = array<i64: 16, 128>}]} {
    %c0 = arith.constant 0 : index
    %c0_0 = arith.constant 0 : index
    %0 = vector.load %arg7[%c0, %c0_0] : memref<16x128xf32, #tpu.memory_space<vmem>>, vector<16x128xf32>
    %1 = tpu.iota {dimensions = array<i32: 1>} : vector<1x128xi32>
    %c32_i32 = arith.constant 32 : i32
    %2 = vector.broadcast %c32_i32 : i32 to vector<1x128xi32>
    %3 = arith.cmpi slt, %1, %2 : vector<1x128xi32>
    %c0_1 = arith.constant 0 : index
    %c0_2 = arith.constant 0 : index
    %4 = vector.load %arg1[%c0_1, %c0_2] : memref<16x128xf32, #tpu.memory_space<vmem>>, vector<16x128xf32>
    %c0_3 = arith.constant 0 : index
    %c0_4 = arith.constant 0 : index
    %5 = vector.load %arg2[%c0_3, %c0_4] : memref<16x128xf32, #tpu.memory_space<vmem>>, vector<16x128xf32>
    %c0_5 = arith.constant 0 : index
    %c0_6 = arith.constant 0 : index
    %6 = vector.load %arg3[%c0_5, %c0_6] : memref<128x128xf32, #tpu.memory_space<vmem>>, vector<128x128xf32>
    %cst = arith.constant dense<0.000000e+00> : vector<16x128xf32>
    %7 = tpu.matmul %4, %6, %cst {dimension_numbers = #tpu.dot_dimension_numbers<[1], [0], [0], [1], [0, 0, 1, 1], [], []>} : vector<16x128xf32>, vector<128x128xf32>, vector<16x128xf32> -> vector<16x128xf32>
    %8 = vector.extract_strided_slice %0 {offsets = [0, 0], sizes = [1, 128], strides = [1, 1]} : vector<16x128xf32> to vector<1x128xf32>
    %9 = vector.broadcast %8 : vector<1x128xf32> to vector<16x128xf32>
    %10 = arith.addf %7, %9 : vector<16x128xf32>
    %11 = arith.addf %4, %10 : vector<16x128xf32>
    %12 = vector.extract_strided_slice %0 {offsets = [3, 0], sizes = [1, 128], strides = [1, 1]} : vector<16x128xf32> to vector<1x128xf32>
    %13 = vector.extract_strided_slice %0 {offsets = [4, 0], sizes = [1, 128], strides = [1, 1]} : vector<16x128xf32> to vector<1x128xf32>
    %cst_7 = arith.constant dense<0.000000e+00> : vector<16xf32>
    %14 = vector.multi_reduction <add>, %11, %cst_7 [1] : vector<16x128xf32> to vector<16xf32>
    %15 = vector.shape_cast %14 : vector<16xf32> to vector<16x1xf32>
    %cst_8 = arith.constant 3.125000e-02 : f32
    %16 = vector.broadcast %cst_8 : f32 to vector<16x1xf32>
    %17 = arith.mulf %15, %16 : vector<16x1xf32>
    %18 = vector.broadcast %17 : vector<16x1xf32> to vector<16x128xf32>
    %19 = arith.subf %11, %18 : vector<16x128xf32>
    %cst_9 = arith.constant 0.000000e+00 : f32
    %20 = vector.shape_cast %3 : vector<1x128xi1> to vector<1x128xi1>
    %21 = vector.broadcast %20 : vector<1x128xi1> to vector<16x128xi1>
    %22 = vector.broadcast %cst_9 : f32 to vector<16x128xf32>
    %23 = arith.select %21, %19, %22 : vector<16x128xi1>, vector<16x128xf32>
    %24 = arith.mulf %23, %23 : vector<16x128xf32>
    %cst_10 = arith.constant dense<0.000000e+00> : vector<16xf32>
    %25 = vector.multi_reduction <add>, %24, %cst_10 [1] : vector<16x128xf32> to vector<16xf32>
    %26 = vector.shape_cast %25 : vector<16xf32> to vector<16x1xf32>
    %cst_11 = arith.constant 3.125000e-02 : f32
    %27 = vector.broadcast %cst_11 : f32 to vector<16x1xf32>
    %28 = arith.mulf %26, %27 : vector<16x1xf32>
    %cst_12 = arith.constant 9.99999974E-6 : f32
    %29 = vector.broadcast %cst_12 : f32 to vector<16x1xf32>
    %30 = arith.addf %28, %29 : vector<16x1xf32>
    %31 = math.rsqrt %30 : vector<16x1xf32>
    %32 = vector.broadcast %31 : vector<16x1xf32> to vector<16x128xf32>
    %33 = arith.mulf %23, %32 : vector<16x128xf32>
    %34 = vector.broadcast %12 : vector<1x128xf32> to vector<16x128xf32>
    %35 = arith.mulf %33, %34 : vector<16x128xf32>
    %36 = vector.broadcast %13 : vector<1x128xf32> to vector<16x128xf32>
    %37 = arith.addf %35, %36 : vector<16x128xf32>
    %c0_13 = arith.constant 0 : index
    %c0_14 = arith.constant 0 : index
    %38 = vector.load %arg4[%c0_13, %c0_14] : memref<128x128xf32, #tpu.memory_space<vmem>>, vector<128x128xf32>
    %cst_15 = arith.constant dense<0.000000e+00> : vector<16x128xf32>
    %39 = tpu.matmul %5, %38, %cst_15 {dimension_numbers = #tpu.dot_dimension_numbers<[1], [0], [0], [1], [0, 0, 1, 1], [], []>} : vector<16x128xf32>, vector<128x128xf32>, vector<16x128xf32> -> vector<16x128xf32>
    %40 = vector.extract_strided_slice %0 {offsets = [1, 0], sizes = [1, 128], strides = [1, 1]} : vector<16x128xf32> to vector<1x128xf32>
    %41 = vector.broadcast %40 : vector<1x128xf32> to vector<16x128xf32>
    %42 = arith.addf %39, %41 : vector<16x128xf32>
    %43 = arith.addf %37, %42 : vector<16x128xf32>
    %44 = vector.extract_strided_slice %0 {offsets = [5, 0], sizes = [1, 128], strides = [1, 1]} : vector<16x128xf32> to vector<1x128xf32>
    %45 = vector.extract_strided_slice %0 {offsets = [6, 0], sizes = [1, 128], strides = [1, 1]} : vector<16x128xf32> to vector<1x128xf32>
    %cst_16 = arith.constant dense<0.000000e+00> : vector<16xf32>
    %46 = vector.multi_reduction <add>, %43, %cst_16 [1] : vector<16x128xf32> to vector<16xf32>
    %47 = vector.shape_cast %46 : vector<16xf32> to vector<16x1xf32>
    %cst_17 = arith.constant 3.125000e-02 : f32
    %48 = vector.broadcast %cst_17 : f32 to vector<16x1xf32>
    %49 = arith.mulf %47, %48 : vector<16x1xf32>
    %50 = vector.broadcast %49 : vector<16x1xf32> to vector<16x128xf32>
    %51 = arith.subf %43, %50 : vector<16x128xf32>
    %cst_18 = arith.constant 0.000000e+00 : f32
    %52 = vector.shape_cast %3 : vector<1x128xi1> to vector<1x128xi1>
    %53 = vector.broadcast %52 : vector<1x128xi1> to vector<16x128xi1>
    %54 = vector.broadcast %cst_18 : f32 to vector<16x128xf32>
    %55 = arith.select %53, %51, %54 : vector<16x128xi1>, vector<16x128xf32>
    %56 = arith.mulf %55, %55 : vector<16x128xf32>
    %cst_19 = arith.constant dense<0.000000e+00> : vector<16xf32>
    %57 = vector.multi_reduction <add>, %56, %cst_19 [1] : vector<16x128xf32> to vector<16xf32>
    %58 = vector.shape_cast %57 : vector<16xf32> to vector<16x1xf32>
    %cst_20 = arith.constant 3.125000e-02 : f32
    %59 = vector.broadcast %cst_20 : f32 to vector<16x1xf32>
    %60 = arith.mulf %58, %59 : vector<16x1xf32>
    %cst_21 = arith.constant 9.99999974E-6 : f32
    %61 = vector.broadcast %cst_21 : f32 to vector<16x1xf32>
    %62 = arith.addf %60, %61 : vector<16x1xf32>
    %63 = math.rsqrt %62 : vector<16x1xf32>
    %64 = vector.broadcast %63 : vector<16x1xf32> to vector<16x128xf32>
    %65 = arith.mulf %55, %64 : vector<16x128xf32>
    %66 = vector.broadcast %44 : vector<1x128xf32> to vector<16x128xf32>
    %67 = arith.mulf %65, %66 : vector<16x128xf32>
    %68 = vector.broadcast %45 : vector<1x128xf32> to vector<16x128xf32>
    %69 = arith.addf %67, %68 : vector<16x128xf32>
    %c0_22 = arith.constant 0 : index
    %c0_23 = arith.constant 0 : index
    %70 = vector.load %arg5[%c0_22, %c0_23] : memref<128x128xf32, #tpu.memory_space<vmem>>, vector<128x128xf32>
    %cst_24 = arith.constant dense<0.000000e+00> : vector<16x128xf32>
    %71 = tpu.matmul %69, %70, %cst_24 {dimension_numbers = #tpu.dot_dimension_numbers<[1], [0], [0], [1], [0, 0, 1, 1], [], []>} : vector<16x128xf32>, vector<128x128xf32>, vector<16x128xf32> -> vector<16x128xf32>
    %c0_25 = arith.constant 0 : index
    %c0_26 = arith.constant 0 : index
    %72 = vector.load %arg8[%c0_25, %c0_26] : memref<1x128xf32, #tpu.memory_space<vmem>>, vector<1x128xf32>
    %73 = vector.broadcast %72 : vector<1x128xf32> to vector<16x128xf32>
    %74 = arith.addf %71, %73 : vector<16x128xf32>
    %cst_27 = arith.constant 0.000000e+00 : f32
    %75 = vector.broadcast %cst_27 : f32 to vector<16x128xf32>
    %76 = arith.maximumf %74, %75 : vector<16x128xf32>
    %c0_28 = arith.constant 0 : index
    %c0_29 = arith.constant 0 : index
    %77 = vector.load %arg6[%c0_28, %c0_29] : memref<128x128xf32, #tpu.memory_space<vmem>>, vector<128x128xf32>
    %cst_30 = arith.constant dense<0.000000e+00> : vector<16x128xf32>
    %78 = tpu.matmul %76, %77, %cst_30 {dimension_numbers = #tpu.dot_dimension_numbers<[1], [0], [0], [1], [0, 0, 1, 1], [], []>} : vector<16x128xf32>, vector<128x128xf32>, vector<16x128xf32> -> vector<16x128xf32>
    %79 = arith.addf %69, %78 : vector<16x128xf32>
    %80 = vector.extract_strided_slice %0 {offsets = [2, 0], sizes = [1, 128], strides = [1, 1]} : vector<16x128xf32> to vector<1x128xf32>
    %81 = vector.broadcast %80 : vector<1x128xf32> to vector<16x128xf32>
    %82 = arith.addf %79, %81 : vector<16x128xf32>
    %83 = vector.extract_strided_slice %0 {offsets = [7, 0], sizes = [1, 128], strides = [1, 1]} : vector<16x128xf32> to vector<1x128xf32>
    %84 = vector.extract_strided_slice %0 {offsets = [8, 0], sizes = [1, 128], strides = [1, 1]} : vector<16x128xf32> to vector<1x128xf32>
    %cst_31 = arith.constant dense<0.000000e+00> : vector<16xf32>
    %85 = vector.multi_reduction <add>, %82, %cst_31 [1] : vector<16x128xf32> to vector<16xf32>
    %86 = vector.shape_cast %85 : vector<16xf32> to vector<16x1xf32>
    %cst_32 = arith.constant 3.125000e-02 : f32
    %87 = vector.broadcast %cst_32 : f32 to vector<16x1xf32>
    %88 = arith.mulf %86, %87 : vector<16x1xf32>
    %89 = vector.broadcast %88 : vector<16x1xf32> to vector<16x128xf32>
    %90 = arith.subf %82, %89 : vector<16x128xf32>
    %cst_33 = arith.constant 0.000000e+00 : f32
    %91 = vector.shape_cast %3 : vector<1x128xi1> to vector<1x128xi1>
    %92 = vector.broadcast %91 : vector<1x128xi1> to vector<16x128xi1>
    %93 = vector.broadcast %cst_33 : f32 to vector<16x128xf32>
    %94 = arith.select %92, %90, %93 : vector<16x128xi1>, vector<16x128xf32>
    %95 = arith.mulf %94, %94 : vector<16x128xf32>
    %cst_34 = arith.constant dense<0.000000e+00> : vector<16xf32>
    %96 = vector.multi_reduction <add>, %95, %cst_34 [1] : vector<16x128xf32> to vector<16xf32>
    %97 = vector.shape_cast %96 : vector<16xf32> to vector<16x1xf32>
    %cst_35 = arith.constant 3.125000e-02 : f32
    %98 = vector.broadcast %cst_35 : f32 to vector<16x1xf32>
    %99 = arith.mulf %97, %98 : vector<16x1xf32>
    %cst_36 = arith.constant 9.99999974E-6 : f32
    %100 = vector.broadcast %cst_36 : f32 to vector<16x1xf32>
    %101 = arith.addf %99, %100 : vector<16x1xf32>
    %102 = math.rsqrt %101 : vector<16x1xf32>
    %103 = vector.broadcast %102 : vector<16x1xf32> to vector<16x128xf32>
    %104 = arith.mulf %94, %103 : vector<16x128xf32>
    %105 = vector.broadcast %83 : vector<1x128xf32> to vector<16x128xf32>
    %106 = arith.mulf %104, %105 : vector<16x128xf32>
    %107 = vector.broadcast %84 : vector<1x128xf32> to vector<16x128xf32>
    %108 = arith.addf %106, %107 : vector<16x128xf32>
    %c0_37 = arith.constant 0 : index
    %c0_38 = arith.constant 0 : index
    %109 = vector.load %arg9[%c0_37, %c0_38] : memref<16x128xf32, #tpu.memory_space<vmem>>, vector<16x128xf32>
    tpu.vector_store %arg9[%c0_37, %c0_38], %108 {strides = array<i32>} : memref<16x128xf32, #tpu.memory_space<vmem>>, vector<16x128xf32>,
    return
  }
  func.func @transform_0(%arg0: i32) -> (i32, i32) {
    %c0_i32 = arith.constant 0 : i32
    %c0_i32_0 = arith.constant 0 : i32
    return %arg0, %c0_i32 : i32, i32
  }
  func.func @transform_1(%arg0: i32) -> (i32, i32) {
    %c0_i32 = arith.constant 0 : i32
    %c0_i32_0 = arith.constant 0 : i32
    return %arg0, %c0_i32 : i32, i32
  }
  func.func @transform_2(%arg0: i32) -> (i32, i32) {
    %c0_i32 = arith.constant 0 : i32
    %c0_i32_0 = arith.constant 0 : i32
    %c0_i32_1 = arith.constant 0 : i32
    return %c0_i32, %c0_i32_0 : i32, i32
  }
  func.func @transform_3(%arg0: i32) -> (i32, i32) {
    %c0_i32 = arith.constant 0 : i32
    %c0_i32_0 = arith.constant 0 : i32
    %c0_i32_1 = arith.constant 0 : i32
    return %c0_i32, %c0_i32_0 : i32, i32
  }
  func.func @transform_4(%arg0: i32) -> (i32, i32) {
    %c0_i32 = arith.constant 0 : i32
    %c0_i32_0 = arith.constant 0 : i32
    %c0_i32_1 = arith.constant 0 : i32
    return %c0_i32, %c0_i32_0 : i32, i32
  }
  func.func @transform_5(%arg0: i32) -> (i32, i32) {
    %c0_i32 = arith.constant 0 : i32
    %c0_i32_0 = arith.constant 0 : i32
    %c0_i32_1 = arith.constant 0 : i32
    return %c0_i32, %c0_i32_0 : i32, i32
  }
  func.func @transform_6(%arg0: i32) -> (i32, i32) {
    %c0_i32 = arith.constant 0 : i32
    %c0_i32_0 = arith.constant 0 : i32
    %c0_i32_1 = arith.constant 0 : i32
    return %c0_i32, %c0_i32_0 : i32, i32
  }
  func.func @transform_7(%arg0: i32) -> (i32, i32) {
    %c0_i32 = arith.constant 0 : i32
    %c0_i32_0 = arith.constant 0 : i32
    %c0_i32_1 = arith.constant 0 : i32
    return %c0_i32, %c0_i32_0 : i32, i32
  }
  func.func @transform_8(%arg0: i32) -> (i32, i32) {
    %c0_i32 = arith.constant 0 : i32
    %c0_i32_0 = arith.constant 0 : i32
    return %arg0, %c0_i32 : i32, i32
  }
}

</mosaic_0001>

<llo_original>
// kernel: mlp_decoder_layer.1
$region0: #{mlp_decoder_layer.1}
  #allocation0 [shape = 'u32[]', space=smem, size = 0x4, offset = 0x4, fixed_abs, tag = 'smem constant byte address 0x4 - core index']
  #allocation1 [shape = 'u32[144,128]{1,0:T(1,128)}', space=vmem, size = 0x12000, scoped, tag = 'internal scratch']
  %s0 = inlined_call_operand.vmem [shape: f32[16,128], index: 0, kind: input, shape index: {}]
  %s1 = inlined_call_operand.vmem [shape: f32[16,128], index: 1, kind: input, shape index: {}]
  %s2 = inlined_call_operand.hbm [shape: f32[128,128], index: 2, kind: input, shape index: {}]
  %s3 = inlined_call_operand.hbm [shape: f32[128,128], index: 3, kind: input, shape index: {}]
  %s4 = inlined_call_operand.hbm [shape: f32[128,128], index: 4, kind: input, shape index: {}]
  %s5 = inlined_call_operand.hbm [shape: f32[128,128], index: 5, kind: input, shape index: {}]
  %s6 = inlined_call_operand.vmem [shape: f32[16,128], index: 6, kind: input, shape index: {}]
  %s7 = inlined_call_operand.vmem [shape: f32[1,128], index: 7, kind: input, shape index: {}]
  %s8 = inlined_call_operand.vmem [shape: f32[16,128], index: 8, kind: output, shape index: {}]
  %s9 = sld [smem:[#allocation0]]
  $region58: #{mlp_decoder_layer.1} parent=0
    _
  %s11 = ssub.s32 1, %s9
  %s12 = scalar_select 0, %s11, %s9
  $region1: #{mlp_decoder_layer.1} parent=0
    #allocation2 [shape = 'u8[65536]{0}', space=vmem, size = 0x10000, scoped, tag = 'input window, operand 2, single buffered']
    #allocation3 [shape = 's32[1]{0}', space=sflag, size = 0x4, scoped, tag = 'scoped memory for mlp_decoder_layer.1']
    #allocation4 [shape = 'u8[65536]{0}', space=vmem, size = 0x10000, scoped, tag = 'input window, operand 3, single buffered']
    #allocation5 [shape = 's32[1]{0}', space=sflag, size = 0x4, scoped, tag = 'scoped memory for mlp_decoder_layer.1']
    #allocation6 [shape = 'u8[65536]{0}', space=vmem, size = 0x10000, scoped, tag = 'input window, operand 4, single buffered']
    #allocation7 [shape = 'u8[65536]{0}', space=vmem, size = 0x10000, scoped, tag = 'input window, operand 5, single buffered']
    #allocation8 [shape = 's32[1]{0}', space=sflag, size = 0x4, scoped, tag = 'scoped memory for mlp_decoder_layer.1']
    %13 = vsyncpa [#allocation3], 0
    %14 = vsyncpa [#allocation5], 0
    %15 = vsyncpa [#allocation8], 0
    // Predicated region
    $region2: #{mlp_decoder_layer.1} parent=1 // pred_check
      _
    $region3: #{mlp_decoder_layer.1} parent=1 // pred_check_branch
      %17 = sbr.rel (0) target = $region5
    $region4: #{mlp_decoder_layer.1} parent=1 // pred_region
      _
    $region5: #{mlp_decoder_layer.1} parent=1 // pred_fallthru
      _
    // Predicated region
    $region6: #{mlp_decoder_layer.1} parent=1 // pred_check
      _
    $region7: #{mlp_decoder_layer.1} parent=1 // pred_check_branch
      %19 = sbr.rel (0) target = $region9
    $region8: #{mlp_decoder_layer.1} parent=1 // pred_region
      _
    $region9: #{mlp_decoder_layer.1} parent=1 // pred_fallthru
      _
    // Predicated region
    $region10: #{mlp_decoder_layer.1} parent=1 // pred_check
      _
    $region11: #{mlp_decoder_layer.1} parent=1 // pred_check_branch
      %21 = sbr.rel (0) target = $region13
    $region12: #{mlp_decoder_layer.1} parent=1 // pred_region
      %s23 = ssub.s32 2048, 2048
      %24 = vsyncadd [#allocation3], %s23
      %s25 = sshll.u32 [#allocation2], 4
      %s26 = int_to_ptr.vmem [resolvable:$true] %s25
      %31 = dma.hbm_to_vmem [thread:$0]  %s2, 2048, %s26, [#allocation3], 128, 128, 8
    $region13: #{mlp_decoder_layer.1} parent=1 // pred_fallthru
      _
    // Predicated region
    $region14: #{mlp_decoder_layer.1} parent=1 // pred_check
      _
    $region15: #{mlp_decoder_layer.1} parent=1 // pred_check_branch
      %33 = sbr.rel (0) target = $region17
    $region16: #{mlp_decoder_layer.1} parent=1 // pred_region
      %s35 = ssub.s32 2048, 2048
      %36 = vsyncadd [#allocation5], %s35
      %s37 = sshll.u32 [#allocation4], 4
      %s38 = int_to_ptr.vmem [resolvable:$true] %s37
      %43 = dma.hbm_to_vmem [thread:$0]  %s3, 2048, %s38, [#allocation5], 128, 128, 8
    $region17: #{mlp_decoder_layer.1} parent=1 // pred_fallthru
      _
    // Predicated region
    $region18: #{mlp_decoder_layer.1} parent=1 // pred_check
      _
    $region19: #{mlp_decoder_layer.1} parent=1 // pred_check_branch
      %45 = sbr.rel (0) target = $region21
    $region20: #{mlp_decoder_layer.1} parent=1 // pred_region
      %s47 = ssub.s32 2048, 2048
      %48 = vsyncadd [#allocation5], %s47
      %s49 = sshll.u32 [#allocation6], 4
      %s50 = int_to_ptr.vmem [resolvable:$true] %s49
      %55 = dma.hbm_to_vmem [thread:$0]  %s4, 2048, %s50, [#allocation5], 128, 128, 8
    $region21: #{mlp_decoder_layer.1} parent=1 // pred_fallthru
      _
    // Predicated region
    $region22: #{mlp_decoder_layer.1} parent=1 // pred_check
      _
    $region23: #{mlp_decoder_layer.1} parent=1 // pred_check_branch
      %57 = sbr.rel (0) target = $region25
    $region24: #{mlp_decoder_layer.1} parent=1 // pred_region
      %s59 = ssub.s32 2048, 2048
      %60 = vsyncadd [#allocation8], %s59
      %s61 = sshll.u32 [#allocation7], 4
      %s62 = int_to_ptr.vmem [resolvable:$true] %s61
      %67 = dma.hbm_to_vmem [thread:$0]  %s5, 2048, %s62, [#allocation8], 128, 128, 8
    $region25: #{mlp_decoder_layer.1} parent=1 // pred_fallthru
      _
    // Predicated region
    $region26: #{mlp_decoder_layer.1} parent=1 // pred_check
      _
    $region27: #{mlp_decoder_layer.1} parent=1 // pred_check_branch
      %69 = sbr.rel (0) target = $region29
    $region28: #{mlp_decoder_layer.1} parent=1 // pred_region
      _
    $region29: #{mlp_decoder_layer.1} parent=1 // pred_fallthru
      _
    // Predicated region
    $region30: #{mlp_decoder_layer.1} parent=1 // pred_check
      _
    $region31: #{mlp_decoder_layer.1} parent=1 // pred_check_branch
      %71 = sbr.rel (0) target = $region33
    $region32: #{mlp_decoder_layer.1} parent=1 // pred_region
      _
    $region33: #{mlp_decoder_layer.1} parent=1 // pred_fallthru
      _
    // Predicated region
    $region34: #{mlp_decoder_layer.1} parent=1 // pred_check
      _
    $region35: #{mlp_decoder_layer.1} parent=1 // pred_check_branch
      %73 = sbr.rel (0) target = $region37
    $region36: #{mlp_decoder_layer.1} parent=1 // pred_region
      %74 = dma.done [#allocation3], 2048
    $region37: #{mlp_decoder_layer.1} parent=1 // pred_fallthru
      _
    // Predicated region
    $region38: #{mlp_decoder_layer.1} parent=1 // pred_check
      _
    $region39: #{mlp_decoder_layer.1} parent=1 // pred_check_branch
      %76 = sbr.rel (0) target = $region41
    $region40: #{mlp_decoder_layer.1} parent=1 // pred_region
      %77 = dma.done [#allocation5], 2048
    $region41: #{mlp_decoder_layer.1} parent=1 // pred_fallthru
      _
    // Predicated region
    $region42: #{mlp_decoder_layer.1} parent=1 // pred_check
      _
    $region43: #{mlp_decoder_layer.1} parent=1 // pred_check_branch
      %79 = sbr.rel (0) target = $region45
    $region44: #{mlp_decoder_layer.1} parent=1 // pred_region
      %80 = dma.done [#allocation5], 2048
    $region45: #{mlp_decoder_layer.1} parent=1 // pred_fallthru
      _
    // Predicated region
    $region46: #{mlp_decoder_layer.1} parent=1 // pred_check
      _
    $region47: #{mlp_decoder_layer.1} parent=1 // pred_check_branch
      %82 = sbr.rel (0) target = $region49
    $region48: #{mlp_decoder_layer.1} parent=1 // pred_region
      %83 = dma.done [#allocation8], 2048
    $region49: #{mlp_decoder_layer.1} parent=1 // pred_fallthru
      _
    %v84 = vld [vmem:[%s6] sm:$0xff]
    %v85 = vld [vmem:[%s6 + $0x8] sm:$0xff]
    %v86 = vlaneseq
    %v87 = vand.u32 %v86, 127
    %vm88 = vcmp.lt.s32.totalorder %v87, 32
    %v89 = vld [vmem:[%s0] sm:$0xff]
    %v90 = vld [vmem:[%s0 + $0x8] sm:$0xff]
    %v91 = vld [vmem:[%s1] sm:$0xff]
    %v92 = vld [vmem:[%s1 + $0x8] sm:$0xff]
    %v93 = vld [vmem:[#allocation2] sm:$0xff]
    %v94 = vld [vmem:[#allocation2 + $0x8] sm:$0xff]
    %v95 = vld [vmem:[#allocation2 + $0x10] sm:$0xff]
    %v96 = vld [vmem:[#allocation2 + $0x18] sm:$0xff]
    %v97 = vld [vmem:[#allocation2 + $0x20] sm:$0xff]
    %v98 = vld [vmem:[#allocation2 + $0x28] sm:$0xff]
    %v99 = vld [vmem:[#allocation2 + $0x30] sm:$0xff]
    %v100 = vld [vmem:[#allocation2 + $0x38] sm:$0xff]
    %v101 = vld [vmem:[#allocation2 + $0x40] sm:$0xff]
    %v102 = vld [vmem:[#allocation2 + $0x48] sm:$0xff]
    %v103 = vld [vmem:[#allocation2 + $0x50] sm:$0xff]
    %v104 = vld [vmem:[#allocation2 + $0x58] sm:$0xff]
    %v105 = vld [vmem:[#allocation2 + $0x60] sm:$0xff]
    %v106 = vld [vmem:[#allocation2 + $0x68] sm:$0xff]
    %v107 = vld [vmem:[#allocation2 + $0x70] sm:$0xff]
    %v108 = vld [vmem:[#allocation2 + $0x78] sm:$0xff]
    %v109 = vlaneseq
    %v110 = vshrl.u32 %v109, 7
    %v111 = vsub.s32 0, %v110
    %v112 = vrot.slane %v84, %v111
    %113 = vmatprep.subr.mxu0 0.0
    %114 = vmatpush1.msra.mxu0 %v108
    %115 = vmatprep.subr.mxu0 0.0
    %116 = vmatpush1.msra.mxu0 %v107
    %117 = vmatprep.subr.mxu0 0.0
    %118 = vmatpush1.msra.mxu0 %v106
    %119 = vmatprep.subr.mxu0 0.0
    %120 = vmatpush1.msra.mxu0 %v105
    %121 = vmatprep.subr.mxu0 0.0
    %122 = vmatpush1.msra.mxu0 %v104
    %123 = vmatprep.subr.mxu0 0.0
    %124 = vmatpush1.msra.mxu0 %v103
    %125 = vmatprep.subr.mxu0 0.0
    %126 = vmatpush1.msra.mxu0 %v102
    %127 = vmatprep.subr.mxu0 0.0
    %128 = vmatpush1.msra.mxu0 %v101
    %129 = vmatprep.subr.mxu0 0.0
    %130 = vmatpush1.msra.mxu0 %v100
    %131 = vmatprep.subr.mxu0 0.0
    %132 = vmatpush1.msra.mxu0 %v99
    %133 = vmatprep.subr.mxu0 0.0
    %134 = vmatpush1.msra.mxu0 %v98
    %135 = vmatprep.subr.mxu0 0.0
    %136 = vmatpush1.msra.mxu0 %v97
    %137 = vmatprep.subr.mxu0 0.0
    %138 = vmatpush1.msra.mxu0 %v96
    %139 = vmatprep.subr.mxu0 0.0
    %140 = vmatpush1.msra.mxu0 %v95
    %141 = vmatprep.subr.mxu0 0.0
    %142 = vmatpush1.msra.mxu0 %v94
    %143 = vmatprep.subr.mxu0 0.0
    %144 = vmatpush1.msra.mxu0 %v93
    %145 = vmatprep.subr.mxu0 0.0
    %146 = vmatpush2.msra.mxu0 0.0
    %147 = vmatprep.subr.mxu0 0.0
    %148 = vmatpush2.msra.mxu0 0.0
    %149 = vmatprep.subr.mxu0 0.0
    %150 = vmatpush2.msra.mxu0 0.0
    %151 = vmatprep.subr.mxu0 0.0
    %152 = vmatpush2.msra.mxu0 0.0
    %153 = vmatprep.subr.mxu0 0.0
    %154 = vmatpush2.msra.mxu0 0.0
    %155 = vmatprep.subr.mxu0 0.0
    %156 = vmatpush2.msra.mxu0 0.0
    %157 = vmatprep.subr.mxu0 0.0
    %158 = vmatpush2.msra.mxu0 0.0
    %159 = vmatprep.subr.mxu0 0.0
    %160 = vmatpush2.msra.mxu0 0.0
    %161 = vmatprep.subr.mxu0 0.0
    %162 = vmatpush2.msra.mxu0 0.0
    %163 = vmatprep.subr.mxu0 0.0
    %164 = vmatpush2.msra.mxu0 0.0
    %165 = vmatprep.subr.mxu0 0.0
    %166 = vmatpush2.msra.mxu0 0.0
    %167 = vmatprep.subr.mxu0 0.0
    %168 = vmatpush2.msra.mxu0 0.0
    %169 = vmatprep.subr.mxu0 0.0
    %170 = vmatpush2.msra.mxu0 0.0
    %171 = vmatprep.subr.mxu0 0.0
    %172 = vmatpush2.msra.mxu0 0.0
    %173 = vmatprep.subr.mxu0 0.0
    %174 = vmatpush2.msra.mxu0 0.0
    %175 = vmatprep.subr.mxu0 0.0
    %176 = vmatpush2.msra.mxu0 0.0
    %177 = vmatprep.mubr.f32.mxu0 0.0
    %178 = vmatmul.mubr.f32.gmra.mxu0 %v89
    %v179 = vpop.f32.mrf.mxu0
    %v180 = vadd.f32 %v112, %v179
    %v181 = vpop.f32.mrf.mxu0
    %182 = vmatprep.mubr.f32.mxu0 0.0
    %183 = vmatmul.mubr.f32.gmra.mxu0 %v90
    %v184 = vpop.f32.mrf.mxu0
    %v185 = vadd.f32 %v112, %v184
    %v186 = vpop.f32.mrf.mxu0
    %187 = vdwg.mxu0
    %v188 = vadd.f32 %v89, %v180
    %v189 = vadd.f32 %v90, %v185
    %190 = vadd.xlane.f32.xlu0 %v188
    %v191 = vpop.xlane.xlu0 %190
    %192 = vadd.xlane.f32.xlu0 %v189
    %v193 = vpop.xlane.xlu0 %192
    %v194 = vmul.f32 %v191, 0.03125
    %v195 = vmul.f32 %v193, 0.03125
    %v196 = vsub.f32 %v188, %v194
    %v197 = vsub.f32 %v189, %v195
    %v198 = vsel %vm88, 1, 0
    %vm199 = vcmp.eq.s32.totalorder %v198, 1
    %v200 = vsel %vm199, %v196, 0.0
    %v201 = vsel %vm199, %v197, 0.0
    %v202 = vmul.f32 %v200, %v200
    %v203 = vmul.f32 %v201, %v201
    %204 = vadd.xlane.f32.xlu0 %v202
    %v205 = vpop.xlane.xlu0 %204
    %206 = vadd.xlane.f32.xlu0 %v203
    %v207 = vpop.xlane.xlu0 %206
    %v208 = vmul.f32 %v205, 0.03125
    %v209 = vmul.f32 %v207, 0.03125
    %v210 = vadd.f32 %v208, 1e-05
    %v211 = vadd.f32 %v209, 1e-05
    %v212 = vrsqrt.pop %v210
    %v213 = vrsqrt.pop %v211
    %v214 = vmul.f32 %v200, %v212
    %v215 = vmul.f32 %v201, %v213
    %v216 = vlaneseq
    %v217 = vshrl.u32 %v216, 7
    %v218 = vsub.s32 3, %v217
    %v219 = vrot.slane %v84, %v218
    %v220 = vmul.f32 %v214, %v219
    %v221 = vmul.f32 %v215, %v219
    %v222 = vlaneseq
    %v223 = vshrl.u32 %v222, 7
    %v224 = vsub.s32 4, %v223
    %v225 = vrot.slane %v84, %v224
    %v226 = vadd.f32 %v220, %v225
    %v227 = vadd.f32 %v221, %v225
    %v228 = vld [vmem:[#allocation4] sm:$0xff]
    %v229 = vld [vmem:[#allocation4 + $0x8] sm:$0xff]
    %v230 = vld [vmem:[#allocation4 + $0x10] sm:$0xff]
    %v231 = vld [vmem:[#allocation4 + $0x18] sm:$0xff]
    %v232 = vld [vmem:[#allocation4 + $0x20] sm:$0xff]
    %v233 = vld [vmem:[#allocation4 + $0x28] sm:$0xff]
    %v234 = vld [vmem:[#allocation4 + $0x30] sm:$0xff]
    %v235 = vld [vmem:[#allocation4 + $0x38] sm:$0xff]
    %v236 = vld [vmem:[#allocation4 + $0x40] sm:$0xff]
    %v237 = vld [vmem:[#allocation4 + $0x48] sm:$0xff]
    %v238 = vld [vmem:[#allocation4 + $0x50] sm:$0xff]
    %v239 = vld [vmem:[#allocation4 + $0x58] sm:$0xff]
    %v240 = vld [vmem:[#allocation4 + $0x60] sm:$0xff]
    %v241 = vld [vmem:[#allocation4 + $0x68] sm:$0xff]
    %v242 = vld [vmem:[#allocation4 + $0x70] sm:$0xff]
    %v243 = vld [vmem:[#allocation4 + $0x78] sm:$0xff]
    %v244 = vlaneseq
    %v245 = vshrl.u32 %v244, 7
    %v246 = vsub.s32 1, %v245
    %v247 = vrot.slane %v84, %v246
    %248 = vmatprep.subr.mxu0 0.0
    %249 = vmatpush1.msra.mxu0 %v243
    %250 = vmatprep.subr.mxu0 0.0
    %251 = vmatpush1.msra.mxu0 %v242
    %252 = vmatprep.subr.mxu0 0.0
    %253 = vmatpush1.msra.mxu0 %v241
    %254 = vmatprep.subr.mxu0 0.0
    %255 = vmatpush1.msra.mxu0 %v240
    %256 = vmatprep.subr.mxu0 0.0
    %257 = vmatpush1.msra.mxu0 %v239
    %258 = vmatprep.subr.mxu0 0.0
    %259 = vmatpush1.msra.mxu0 %v238
    %260 = vmatprep.subr.mxu0 0.0
    %261 = vmatpush1.msra.mxu0 %v237
    %262 = vmatprep.subr.mxu0 0.0
    %263 = vmatpush1.msra.mxu0 %v236
    %264 = vmatprep.subr.mxu0 0.0
    %265 = vmatpush1.msra.mxu0 %v235
    %266 = vmatprep.subr.mxu0 0.0
    %267 = vmatpush1.msra.mxu0 %v234
    %268 = vmatprep.subr.mxu0 0.0
    %269 = vmatpush1.msra.mxu0 %v233
    %270 = vmatprep.subr.mxu0 0.0
    %271 = vmatpush1.msra.mxu0 %v232
    %272 = vmatprep.subr.mxu0 0.0
    %273 = vmatpush1.msra.mxu0 %v231
    %274 = vmatprep.subr.mxu0 0.0
    %275 = vmatpush1.msra.mxu0 %v230
    %276 = vmatprep.subr.mxu0 0.0
    %277 = vmatpush1.msra.mxu0 %v229
    %278 = vmatprep.subr.mxu0 0.0
    %279 = vmatpush1.msra.mxu0 %v228
    %280 = vmatprep.subr.mxu0 0.0
    %281 = vmatpush2.msra.mxu0 0.0
    %282 = vmatprep.subr.mxu0 0.0
    %283 = vmatpush2.msra.mxu0 0.0
    %284 = vmatprep.subr.mxu0 0.0
    %285 = vmatpush2.msra.mxu0 0.0
    %286 = vmatprep.subr.mxu0 0.0
    %287 = vmatpush2.msra.mxu0 0.0
    %288 = vmatprep.subr.mxu0 0.0
    %289 = vmatpush2.msra.mxu0 0.0
    %290 = vmatprep.subr.mxu0 0.0
    %291 = vmatpush2.msra.mxu0 0.0
    %292 = vmatprep.subr.mxu0 0.0
    %293 = vmatpush2.msra.mxu0 0.0
    %294 = vmatprep.subr.mxu0 0.0
    %295 = vmatpush2.msra.mxu0 0.0
    %296 = vmatprep.subr.mxu0 0.0
    %297 = vmatpush2.msra.mxu0 0.0
    %298 = vmatprep.subr.mxu0 0.0
    %299 = vmatpush2.msra.mxu0 0.0
    %300 = vmatprep.subr.mxu0 0.0
    %301 = vmatpush2.msra.mxu0 0.0
    %302 = vmatprep.subr.mxu0 0.0
    %303 = vmatpush2.msra.mxu0 0.0
    %304 = vmatprep.subr.mxu0 0.0
    %305 = vmatpush2.msra.mxu0 0.0
    %306 = vmatprep.subr.mxu0 0.0
    %307 = vmatpush2.msra.mxu0 0.0
    %308 = vmatprep.subr.mxu0 0.0
    %309 = vmatpush2.msra.mxu0 0.0
    %310 = vmatprep.subr.mxu0 0.0
    %311 = vmatpush2.msra.mxu0 0.0
    %312 = vmatprep.mubr.f32.mxu0 0.0
    %313 = vmatmul.mubr.f32.gmra.mxu0 %v91
    %v314 = vpop.f32.mrf.mxu0
    %v315 = vadd.f32 %v247, %v314
    %v316 = vpop.f32.mrf.mxu0
    %317 = vmatprep.mubr.f32.mxu0 0.0
    %318 = vmatmul.mubr.f32.gmra.mxu0 %v92
    %v319 = vpop.f32.mrf.mxu0
    %v320 = vadd.f32 %v247, %v319
    %v321 = vpop.f32.mrf.mxu0
    %322 = vdwg.mxu0
    %v323 = vadd.f32 %v226, %v315
    %v324 = vadd.f32 %v227, %v320
    %325 = vadd.xlane.f32.xlu0 %v323
    %v326 = vpop.xlane.xlu0 %325
    %327 = vadd.xlane.f32.xlu0 %v324
    %v328 = vpop.xlane.xlu0 %327
    %v329 = vmul.f32 %v326, 0.03125
    %v330 = vmul.f32 %v328, 0.03125
    %v331 = vsub.f32 %v323, %v329
    %v332 = vsub.f32 %v324, %v330
    %v333 = vsel %vm199, %v331, 0.0
    %v334 = vsel %vm199, %v332, 0.0
    %v335 = vmul.f32 %v333, %v333
    %v336 = vmul.f32 %v334, %v334
    %337 = vadd.xlane.f32.xlu0 %v335
    %v338 = vpop.xlane.xlu0 %337
    %339 = vadd.xlane.f32.xlu0 %v336
    %v340 = vpop.xlane.xlu0 %339
    %v341 = vmul.f32 %v338, 0.03125
    %v342 = vmul.f32 %v340, 0.03125
    %v343 = vadd.f32 %v341, 1e-05
    %v344 = vadd.f32 %v342, 1e-05
    %v345 = vrsqrt.pop %v343
    %v346 = vrsqrt.pop %v344
    %v347 = vmul.f32 %v333, %v345
    %v348 = vmul.f32 %v334, %v346
    %v349 = vlaneseq
    %v350 = vshrl.u32 %v349, 7
    %v351 = vsub.s32 5, %v350
    %v352 = vrot.slane %v84, %v351
    %v353 = vmul.f32 %v347, %v352
    %v354 = vmul.f32 %v348, %v352
    %v355 = vlaneseq
    %v356 = vshrl.u32 %v355, 7
    %v357 = vsub.s32 6, %v356
    %v358 = vrot.slane %v84, %v357
    %v359 = vadd.f32 %v353, %v358
    %v360 = vadd.f32 %v354, %v358
    %v361 = vld [vmem:[#allocation6] sm:$0xff]
    %v362 = vld [vmem:[#allocation6 + $0x8] sm:$0xff]
    %v363 = vld [vmem:[#allocation6 + $0x10] sm:$0xff]
    %v364 = vld [vmem:[#allocation6 + $0x18] sm:$0xff]
    %v365 = vld [vmem:[#allocation6 + $0x20] sm:$0xff]
    %v366 = vld [vmem:[#allocation6 + $0x28] sm:$0xff]
    %v367 = vld [vmem:[#allocation6 + $0x30] sm:$0xff]
    %v368 = vld [vmem:[#allocation6 + $0x38] sm:$0xff]
    %v369 = vld [vmem:[#allocation6 + $0x40] sm:$0xff]
    %v370 = vld [vmem:[#allocation6 + $0x48] sm:$0xff]
    %v371 = vld [vmem:[#allocation6 + $0x50] sm:$0xff]
    %v372 = vld [vmem:[#allocation6 + $0x58] sm:$0xff]
    %v373 = vld [vmem:[#allocation6 + $0x60] sm:$0xff]
    %v374 = vld [vmem:[#allocation6 + $0x68] sm:$0xff]
    %v375 = vld [vmem:[#allocation6 + $0x70] sm:$0xff]
    %v376 = vld [vmem:[#allocation6 + $0x78] sm:$0xff]
    %v377 = vld [vmem:[%s7] sm:$0x1]
    %v379 = vlaneseq
    %v380 = vshrl.u32 %v379, 7
    %v381 = vsub.s32 0, %v380
    %v382 = vrot.slane %v377, %v381
    %384 = vmatprep.subr.mxu0 0.0
    %385 = vmatpush1.msra.mxu0 %v376
    %386 = vmatprep.subr.mxu0 0.0
    %387 = vmatpush1.msra.mxu0 %v375
    %388 = vmatprep.subr.mxu0 0.0
    %389 = vmatpush1.msra.mxu0 %v374
    %390 = vmatprep.subr.mxu0 0.0
    %391 = vmatpush1.msra.mxu0 %v373
    %392 = vmatprep.subr.mxu0 0.0
    %393 = vmatpush1.msra.mxu0 %v372
    %394 = vmatprep.subr.mxu0 0.0
    %395 = vmatpush1.msra.mxu0 %v371
    %396 = vmatprep.subr.mxu0 0.0
    %397 = vmatpush1.msra.mxu0 %v370
    %398 = vmatprep.subr.mxu0 0.0
    %399 = vmatpush1.msra.mxu0 %v369
    %400 = vmatprep.subr.mxu0 0.0
    %401 = vmatpush1.msra.mxu0 %v368
    %402 = vmatprep.subr.mxu0 0.0
    %403 = vmatpush1.msra.mxu0 %v367
    %404 = vmatprep.subr.mxu0 0.0
    %405 = vmatpush1.msra.mxu0 %v366
    %406 = vmatprep.subr.mxu0 0.0
    %407 = vmatpush1.msra.mxu0 %v365
    %408 = vmatprep.subr.mxu0 0.0
    %409 = vmatpush1.msra.mxu0 %v364
    %410 = vmatprep.subr.mxu0 0.0
    %411 = vmatpush1.msra.mxu0 %v363
    %412 = vmatprep.subr.mxu0 0.0
    %413 = vmatpush1.msra.mxu0 %v362
    %414 = vmatprep.subr.mxu0 0.0
    %415 = vmatpush1.msra.mxu0 %v361
    %416 = vmatprep.subr.mxu0 0.0
    %417 = vmatpush2.msra.mxu0 0.0
    %418 = vmatprep.subr.mxu0 0.0
    %419 = vmatpush2.msra.mxu0 0.0
    %420 = vmatprep.subr.mxu0 0.0
    %421 = vmatpush2.msra.mxu0 0.0
    %422 = vmatprep.subr.mxu0 0.0
    %423 = vmatpush2.msra.mxu0 0.0
    %424 = vmatprep.subr.mxu0 0.0
    %425 = vmatpush2.msra.mxu0 0.0
    %426 = vmatprep.subr.mxu0 0.0
    %427 = vmatpush2.msra.mxu0 0.0
    %428 = vmatprep.subr.mxu0 0.0
    %429 = vmatpush2.msra.mxu0 0.0
    %430 = vmatprep.subr.mxu0 0.0
    %431 = vmatpush2.msra.mxu0 0.0
    %432 = vmatprep.subr.mxu0 0.0
    %433 = vmatpush2.msra.mxu0 0.0
    %434 = vmatprep.subr.mxu0 0.0
    %435 = vmatpush2.msra.mxu0 0.0
    %436 = vmatprep.subr.mxu0 0.0
    %437 = vmatpush2.msra.mxu0 0.0
    %438 = vmatprep.subr.mxu0 0.0
    %439 = vmatpush2.msra.mxu0 0.0
    %440 = vmatprep.subr.mxu0 0.0
    %441 = vmatpush2.msra.mxu0 0.0
    %442 = vmatprep.subr.mxu0 0.0
    %443 = vmatpush2.msra.mxu0 0.0
    %444 = vmatprep.subr.mxu0 0.0
    %445 = vmatpush2.msra.mxu0 0.0
    %446 = vmatprep.subr.mxu0 0.0
    %447 = vmatpush2.msra.mxu0 0.0
    %448 = vmatprep.mubr.f32.mxu0 0.0
    %449 = vmatmul.mubr.f32.gmra.mxu0 %v359
    %v450 = vpop.f32.mrf.mxu0
    %v451 = vadd.f32 %v382, %v450
    %v452 = vpop.f32.mrf.mxu0
    %453 = vmatprep.mubr.f32.mxu0 0.0
    %454 = vmatmul.mubr.f32.gmra.mxu0 %v360
    %v455 = vpop.f32.mrf.mxu0
    %v456 = vadd.f32 %v382, %v455
    %v457 = vpop.f32.mrf.mxu0
    %458 = vdwg.mxu0
    %v459 = vmax.f32 %v451, 0.0
    %v460 = vmax.f32 %v456, 0.0
    %v461 = vld [vmem:[#allocation7] sm:$0xff]
    %v462 = vld [vmem:[#allocation7 + $0x8] sm:$0xff]
    %v463 = vld [vmem:[#allocation7 + $0x10] sm:$0xff]
    %v464 = vld [vmem:[#allocation7 + $0x18] sm:$0xff]
    %v465 = vld [vmem:[#allocation7 + $0x20] sm:$0xff]
    %v466 = vld [vmem:[#allocation7 + $0x28] sm:$0xff]
    %v467 = vld [vmem:[#allocation7 + $0x30] sm:$0xff]
    %v468 = vld [vmem:[#allocation7 + $0x38] sm:$0xff]
    %v469 = vld [vmem:[#allocation7 + $0x40] sm:$0xff]
    %v470 = vld [vmem:[#allocation7 + $0x48] sm:$0xff]
    %v471 = vld [vmem:[#allocation7 + $0x50] sm:$0xff]
    %v472 = vld [vmem:[#allocation7 + $0x58] sm:$0xff]
    %v473 = vld [vmem:[#allocation7 + $0x60] sm:$0xff]
    %v474 = vld [vmem:[#allocation7 + $0x68] sm:$0xff]
    %v475 = vld [vmem:[#allocation7 + $0x70] sm:$0xff]
    %v476 = vld [vmem:[#allocation7 + $0x78] sm:$0xff]
    %477 = vmatprep.subr.mxu0 0.0
    %478 = vmatpush1.msra.mxu0 %v476
    %479 = vmatprep.subr.mxu0 0.0
    %480 = vmatpush1.msra.mxu0 %v475
    %481 = vmatprep.subr.mxu0 0.0
    %482 = vmatpush1.msra.mxu0 %v474
    %483 = vmatprep.subr.mxu0 0.0
    %484 = vmatpush1.msra.mxu0 %v473
    %485 = vmatprep.subr.mxu0 0.0
    %486 = vmatpush1.msra.mxu0 %v472
    %487 = vmatprep.subr.mxu0 0.0
    %488 = vmatpush1.msra.mxu0 %v471
    %489 = vmatprep.subr.mxu0 0.0
    %490 = vmatpush1.msra.mxu0 %v470
    %491 = vmatprep.subr.mxu0 0.0
    %492 = vmatpush1.msra.mxu0 %v469
    %493 = vmatprep.subr.mxu0 0.0
    %494 = vmatpush1.msra.mxu0 %v468
    %495 = vmatprep.subr.mxu0 0.0
    %496 = vmatpush1.msra.mxu0 %v467
    %497 = vmatprep.subr.mxu0 0.0
    %498 = vmatpush1.msra.mxu0 %v466
    %499 = vmatprep.subr.mxu0 0.0
    %500 = vmatpush1.msra.mxu0 %v465
    %501 = vmatprep.subr.mxu0 0.0
    %502 = vmatpush1.msra.mxu0 %v464
    %503 = vmatprep.subr.mxu0 0.0
    %504 = vmatpush1.msra.mxu0 %v463
    %505 = vmatprep.subr.mxu0 0.0
    %506 = vmatpush1.msra.mxu0 %v462
    %507 = vmatprep.subr.mxu0 0.0
    %508 = vmatpush1.msra.mxu0 %v461
    %509 = vmatprep.subr.mxu0 0.0
    %510 = vmatpush2.msra.mxu0 0.0
    %511 = vmatprep.subr.mxu0 0.0
    %512 = vmatpush2.msra.mxu0 0.0
    %513 = vmatprep.subr.mxu0 0.0
    %514 = vmatpush2.msra.mxu0 0.0
    %515 = vmatprep.subr.mxu0 0.0
    %516 = vmatpush2.msra.mxu0 0.0
    %517 = vmatprep.subr.mxu0 0.0
    %518 = vmatpush2.msra.mxu0 0.0
    %519 = vmatprep.subr.mxu0 0.0
    %520 = vmatpush2.msra.mxu0 0.0
    %521 = vmatprep.subr.mxu0 0.0
    %522 = vmatpush2.msra.mxu0 0.0
    %523 = vmatprep.subr.mxu0 0.0
    %524 = vmatpush2.msra.mxu0 0.0
    %525 = vmatprep.subr.mxu0 0.0
    %526 = vmatpush2.msra.mxu0 0.0
    %527 = vmatprep.subr.mxu0 0.0
    %528 = vmatpush2.msra.mxu0 0.0
    %529 = vmatprep.subr.mxu0 0.0
    %530 = vmatpush2.msra.mxu0 0.0
    %531 = vmatprep.subr.mxu0 0.0
    %532 = vmatpush2.msra.mxu0 0.0
    %533 = vmatprep.subr.mxu0 0.0
    %534 = vmatpush2.msra.mxu0 0.0
    %535 = vmatprep.subr.mxu0 0.0
    %536 = vmatpush2.msra.mxu0 0.0
    %537 = vmatprep.subr.mxu0 0.0
    %538 = vmatpush2.msra.mxu0 0.0
    %539 = vmatprep.subr.mxu0 0.0
    %540 = vmatpush2.msra.mxu0 0.0
    %541 = vmatprep.mubr.f32.mxu0 0.0
    %542 = vmatmul.mubr.f32.gmra.mxu0 %v459
    %v543 = vpop.f32.mrf.mxu0
    %v544 = vadd.f32 0.0, %v543
    %v545 = vpop.f32.mrf.mxu0
    %546 = vmatprep.mubr.f32.mxu0 0.0
    %547 = vmatmul.mubr.f32.gmra.mxu0 %v460
    %v548 = vpop.f32.mrf.mxu0
    %v549 = vadd.f32 0.0, %v548
    %v550 = vpop.f32.mrf.mxu0
    %551 = vdwg.mxu0
    %v552 = vadd.f32 %v359, %v544
    %v553 = vadd.f32 %v360, %v549
    %v554 = vlaneseq
    %v555 = vshrl.u32 %v554, 7
    %v556 = vsub.s32 2, %v555
    %v557 = vrot.slane %v84, %v556
    %v558 = vadd.f32 %v552, %v557
    %v559 = vadd.f32 %v553, %v557
    %560 = vadd.xlane.f32.xlu0 %v558
    %v561 = vpop.xlane.xlu0 %560
    %562 = vadd.xlane.f32.xlu0 %v559
    %v563 = vpop.xlane.xlu0 %562
    %v564 = vmul.f32 %v561, 0.03125
    %v565 = vmul.f32 %v563, 0.03125
    %v566 = vsub.f32 %v558, %v564
    %v567 = vsub.f32 %v559, %v565
    %v568 = vsel %vm199, %v566, 0.0
    %v569 = vsel %vm199, %v567, 0.0
    %v570 = vmul.f32 %v568, %v568
    %v571 = vmul.f32 %v569, %v569
    %572 = vadd.xlane.f32.xlu0 %v570
    %v573 = vpop.xlane.xlu0 %572
    %574 = vadd.xlane.f32.xlu0 %v571
    %v575 = vpop.xlane.xlu0 %574
    %v576 = vmul.f32 %v573, 0.03125
    %v577 = vmul.f32 %v575, 0.03125
    %v578 = vadd.f32 %v576, 1e-05
    %v579 = vadd.f32 %v577, 1e-05
    %v580 = vrsqrt.pop %v578
    %v581 = vrsqrt.pop %v579
    %v582 = vmul.f32 %v568, %v580
    %v583 = vmul.f32 %v569, %v581
    %v584 = vlaneseq
    %v585 = vshrl.u32 %v584, 7
    %v586 = vsub.s32 7, %v585
    %v587 = vrot.slane %v84, %v586
    %v588 = vmul.f32 %v582, %v587
    %v589 = vmul.f32 %v583, %v587
    %v590 = vlaneseq
    %v591 = vshrl.u32 %v590, 7
    %v592 = vsub.s32 0, %v591
    %v593 = vrot.slane %v85, %v592
    %v594 = vadd.f32 %v588, %v593
    %v595 = vadd.f32 %v589, %v593
    %596 = vst [vmem:[%s8] sm:$0xff] %v594
    %597 = vst [vmem:[%s8 + $0x8] sm:$0xff] %v595
    // Predicated region
    $region50: #{mlp_decoder_layer.1} parent=1 // pred_check
      _
    $region51: #{mlp_decoder_layer.1} parent=1 // pred_check_branch
      %599 = sbr.rel (0) target = $region53
    $region52: #{mlp_decoder_layer.1} parent=1 // pred_region
      _
    $region53: #{mlp_decoder_layer.1} parent=1 // pred_fallthru
      _
    // Predicated region
    $region54: #{mlp_decoder_layer.1} parent=1 // pred_check
      _
    $region55: #{mlp_decoder_layer.1} parent=1 // pred_check_branch
      %601 = sbr.rel (0) target = $region57
    $region56: #{mlp_decoder_layer.1} parent=1 // pred_region
      _
    $region57: #{mlp_decoder_layer.1} parent=1 // pred_fallthru
      _
    %602 = vsyncpa [#allocation3], 1
    %603 = vsyncpa [#allocation5], 1
    %604 = vsyncpa [#allocation8], 1

</llo_original>
